<compile_context>
chip_gen: v7x
topology: tpu7x:2x2x1
jax: 0.10.0
libtpu: 0.0.40
codegen_flags: <defaults>
</compile_context>

<pallas_src>
import jax
import jax.numpy as jnp
from jax.experimental import pallas as pl
from jax.experimental.pallas import tpu as pltpu

V_THRESHOLD = 1.0
TAU = 2.0
INV_TAU = 1.0 / TAU
EPS = 1e-8
LANES = 128


# ----------------------------------------------------------------------------
# Kernel 1: multi-step LIF neuron.
# Grid = (row_blocks [parallel], time_blocks [arbitrary]); each grid block holds
# TT timesteps of a lane-dense (RS, 128) feature slab. Membrane potential lives
# in a VMEM scratch that persists across the (innermost) time axis.
# ----------------------------------------------------------------------------
def _lif_kernel(x_ref, out_ref, v_ref):
    @pl.when(pl.program_id(1) == 0)  # first time-chunk of this row block
    def _():
        v_ref[...] = jnp.zeros_like(v_ref)

    tt = x_ref.shape[0]  # static timesteps per block

    def step(t, carry):
        x = x_ref[t].astype(jnp.float32)            # (RS, 128)
        v = v_ref[...]
        h = v + (x - v) * INV_TAU                   # leaky charge (tau=2, v_reset=0)
        fired = h >= V_THRESHOLD                    # fire
        v_ref[...] = jnp.where(fired, 0.0, h)       # hard reset to 0
        out_ref[t] = jnp.where(fired, 1.0, 0.0).astype(out_ref.dtype)
        return carry

    jax.lax.fori_loop(0, tt, step, 0, unroll=True)


def multistep_lif_node(x_seq: jax.Array, *, spike_dtype=None, time_block: int = 16):
    """x_seq: [T, N, D] -> spikes [T, N, D] (values are exactly 0/1)."""
    T, N, D = x_seq.shape
    out_dtype = jnp.dtype(spike_dtype) if spike_dtype is not None else jnp.dtype(x_seq.dtype)

    # Lane-dense layout: flatten (N, D) and view it as S rows of 128 lanes.
    M = N * D
    S = pl.cdiv(M, LANES)
    P = S * LANES

    # Row-block size: full S for small problems, else a divisor that is a multiple
    # of 32 (safe for f32 / bf16 / int8 packing) to expose megacore parallelism.
    RS = S
    for cand in (64, 32):
        if S % cand == 0 and S // cand >= 2:
            RS = cand
            break
    GR = S // RS

    # Time-chunk size: amortize per-grid-step overhead, but keep the
    # double-buffered in/out blocks + scratch well under the scoped VMEM limit
    # (32 MiB limit requested below; works on v5e/v6e/v7x).
    in_item = jnp.dtype(x_seq.dtype).itemsize
    out_item = out_dtype.itemsize

    def _block_bytes(tt):
        return 2 * tt * RS * LANES * (in_item + out_item) + RS * LANES * 4

    TT = max(1, min(time_block, T))
    while TT > 1 and _block_bytes(TT) > 12 * 1024 * 1024:
        TT //= 2
    GT = pl.cdiv(T, TT)
    T_pad = GT * TT

    x2 = x_seq.reshape(T, M)
    if P > M:
        x2 = jnp.pad(x2, ((0, 0), (0, P - M)))      # zero input -> never spikes
    if T_pad > T:
        x2 = jnp.pad(x2, ((0, T_pad - T), (0, 0)))  # trailing padded steps discarded
    x3 = x2.reshape(T_pad, S, LANES)

    out3 = pl.pallas_call(
        _lif_kernel,
        out_shape=jax.ShapeDtypeStruct((T_pad, S, LANES), out_dtype),
        grid_spec=pltpu.PrefetchScalarGridSpec(
            num_scalar_prefetch=0,
            grid=(GR, GT),
            in_specs=[pl.BlockSpec((TT, RS, LANES), lambda r, t: (t, r, 0))],
            out_specs=pl.BlockSpec((TT, RS, LANES), lambda r, t: (t, r, 0)),
            scratch_shapes=[pltpu.VMEM((RS, LANES), jnp.float32)],
        ),
        compiler_params=pltpu.CompilerParams(
            dimension_semantics=("parallel", "arbitrary"),  # rows parallel, time is a carry
            vmem_limit_bytes=32 * 1024 * 1024,
        ),
    )(x3)

    return out3.reshape(T_pad, P)[:T, :M].reshape(T, N, D)


# ----------------------------------------------------------------------------
# Kernel 2: Lorentz expmap  exp_z(v) = cosh(||v||_L) z + sinh(||v||_L) v / ||v||_L
# ----------------------------------------------------------------------------
def _lorentz_expmap_kernel(z_ref, v_ref, out_ref):
    z = z_ref[...].astype(jnp.float32)
    v = v_ref[...].astype(jnp.float32)

    v0 = v[:, 0:1]
    # <v, v>_L = sum(v*v) - 2*v0^2  (no materialized sign array)
    inner = jnp.sum(v * v, axis=-1, keepdims=True) - 2.0 * v0 * v0
    nrm = jnp.sqrt(jnp.maximum(inner, EPS))          # >= 1e-4, so divisions are safe

    e = jnp.exp(nrm)                                 # single transcendental
    einv = 1.0 / e
    cosh = 0.5 * (e + einv)
    sinh = 0.5 * (e - einv)

    out = cosh * z + (sinh / nrm) * v
    out_ref[...] = out.astype(out_ref.dtype)


def lorentz_expmap(z: jax.Array, v: jax.Array) -> jax.Array:
    N, D = z.shape
    # Tile N when large (pipelining + megacore); tiny N -> single block.
    TN = N
    for cand in (512, 256, 128, 64, 32, 16, 8):
        if N % cand == 0 and N // cand >= 2:
            TN = cand
            break
    return pl.pallas_call(
        _lorentz_expmap_kernel,
        out_shape=jax.ShapeDtypeStruct((N, D), z.dtype),
        grid_spec=pltpu.PrefetchScalarGridSpec(
            num_scalar_prefetch=0,
            grid=(N // TN,),
            in_specs=[
                pl.BlockSpec((TN, D), lambda i: (i, 0)),
                pl.BlockSpec((TN, D), lambda i: (i, 0)),
            ],
            out_specs=pl.BlockSpec((TN, D), lambda i: (i, 0)),
        ),
        compiler_params=pltpu.CompilerParams(dimension_semantics=("parallel",)),
    )(z, v)


# ----------------------------------------------------------------------------
# LIFNode.forward equivalent
# ----------------------------------------------------------------------------
def lif_node_forward(x_seq, v_seq, z_seq, *, spike_dtype=None):
    out_seq = multistep_lif_node(x_seq, spike_dtype=spike_dtype)
    z_out_seq = lorentz_expmap(z_seq, v_seq)
    return out_seq, z_out_seq


# ----------------------------------------------------------------------------
# Pure-JAX references for verification
# ----------------------------------------------------------------------------
def _ref_lif(x_seq):
    def step(v, x):
        h = v + (x - v) / TAU
        s = (h >= V_THRESHOLD).astype(x.dtype)
        return jnp.where(s > 0, 0.0, h), s

    _, spikes = jax.lax.scan(step, jnp.zeros_like(x_seq[0]), x_seq)
    return spikes


def _ref_expmap(z, v):
    sign = jnp.concatenate(
        [-jnp.ones((1,), jnp.float32), jnp.ones((z.shape[1] - 1,), jnp.float32)]
    )
    inner = jnp.sum(sign * v * v, axis=-1, keepdims=True)
    nrm = jnp.sqrt(jnp.maximum(inner, EPS))
    return jnp.cosh(nrm) * z + (jnp.sinh(nrm) / nrm) * v


if __name__ == "__main__":
    T, N, D = 8, 8, 32
    key = jax.random.PRNGKey(0)
    kx, kz, kv = jax.random.split(key, 3)

    # Input current sequence [T, N, D]
    x_seq = jax.random.normal(kx, (T, N, D), dtype=jnp.float32)

    # z_seq: points on the Lorentz hyperboloid (z0 = sqrt(1 + ||z_space||^2))
    z_space = 0.1 * jax.random.normal(kz, (N, D - 1), dtype=jnp.float32)
    z0 = jnp.sqrt(1.0 + jnp.sum(z_space * z_space, axis=-1, keepdims=True))
    z_seq = jnp.concatenate([z0, z_space], axis=-1)

    # v_seq: tangent vectors at z_seq
    v_raw = 0.1 * jax.random.normal(kv, (N, D), dtype=jnp.float32)
    sign = jnp.concatenate(
        [-jnp.ones((1,), jnp.float32), jnp.ones((D - 1,), jnp.float32)]
    )
    zv_inner = jnp.sum(sign * z_seq * v_raw, axis=-1, keepdims=True)
    v_seq = v_raw + zv_inner * z_seq

    # bf16 spikes: values are exactly 0/1, so this is lossless and halves writeback.
    out_seq, z_out_seq = lif_node_forward(
        x_seq, v_seq, z_seq, spike_dtype=jnp.bfloat16
    )
    jax.block_until_ready((out_seq, z_out_seq))

    # Verify against pure-JAX references
    ref_out = _ref_lif(x_seq)
    ref_z = _ref_expmap(z_seq, v_seq)
    assert out_seq.shape == (T, N, D) and z_out_seq.shape == (N, D)
    assert jnp.allclose(out_seq.astype(jnp.float32), ref_out, atol=1e-6), "LIF spikes mismatch"
    assert jnp.allclose(z_out_seq, ref_z, atol=2e-5), "expmap mismatch"

    print("KERNEL_OK")
</pallas_src>

<mosaic_0001>
module attributes {stable_mosaic.version = 11 : i64} {
  func.func @_lif_kernel(%arg0: i32, %arg1: i32, %arg2: memref<8x2x128xf32, #tpu.memory_space<vmem>>, %arg3: memref<8x2x128xbf16, #tpu.memory_space<vmem>>, %arg4: memref<2x128xf32, #tpu.memory_space<vmem>>) attributes {dimension_semantics = [#tpu.dimension_semantics<parallel>, #tpu.dimension_semantics<arbitrary>], iteration_bounds = array<i64: 1, 1>, scalar_prefetch = 0 : i64, scratch_operands = 1 : i64, tpu.core_type = #tpu.core_type<tc>, window_params = [{transform_indices = @transform_0, window_bounds = array<i64: 8, 2, 128>}, {transform_indices = @transform_1, window_bounds = array<i64: 8, 2, 128>}]} {
    %c0_i32 = arith.constant 0 : i32
    %0 = arith.cmpi eq, %arg1, %c0_i32 : i32
    %1 = arith.extui %0 : i1 to i32
    %c0_i32_0 = arith.constant 0 : i32
    %2 = arith.cmpi ne, %1, %c0_i32_0 : i32
    scf.if %2 {
      %cst_104 = arith.constant 0.000000e+00 : f32
      %171 = vector.broadcast %cst_104 : f32 to vector<2x128xf32>
      %c0_105 = arith.constant 0 : index
      %c0_106 = arith.constant 0 : index
      %172 = vector.load %arg4[%c0_105, %c0_106] : memref<2x128xf32, #tpu.memory_space<vmem>>, vector<2x128xf32>
      tpu.vector_store %arg4[%c0_105, %c0_106], %171 {strides = array<i32>} : memref<2x128xf32, #tpu.memory_space<vmem>>, vector<2x128xf32>,
    } else {
    }
    %c0_i32_1 = arith.constant 0 : i32
    %3 = arith.index_cast %c0_i32_1 : i32 to index
    %c0 = arith.constant 0 : index
    %c0_2 = arith.constant 0 : index
    %4 = vector.load %arg2[%3, %c0, %c0_2] : memref<8x2x128xf32, #tpu.memory_space<vmem>>, vector<1x2x128xf32>
    %5 = vector.shape_cast %4 : vector<1x2x128xf32> to vector<2x128xf32>
    %c0_3 = arith.constant 0 : index
    %c0_4 = arith.constant 0 : index
    %6 = vector.load %arg4[%c0_3, %c0_4] : memref<2x128xf32, #tpu.memory_space<vmem>>, vector<2x128xf32>
    %7 = arith.subf %5, %6 : vector<2x128xf32>
    %cst = arith.constant 5.000000e-01 : f32
    %8 = vector.broadcast %cst : f32 to vector<2x128xf32>
    %9 = arith.mulf %7, %8 : vector<2x128xf32>
    %10 = arith.addf %6, %9 : vector<2x128xf32>
    %cst_5 = arith.constant 1.000000e+00 : f32
    %11 = vector.broadcast %cst_5 : f32 to vector<2x128xf32>
    %12 = arith.cmpf oge, %10, %11 : vector<2x128xf32>
    %cst_6 = arith.constant 0.000000e+00 : f32
    %13 = vector.broadcast %cst_6 : f32 to vector<2x128xf32>
    %14 = arith.select %12, %13, %10 : vector<2x128xi1>, vector<2x128xf32>
    %c0_7 = arith.constant 0 : index
    %c0_8 = arith.constant 0 : index
    %15 = vector.load %arg4[%c0_7, %c0_8] : memref<2x128xf32, #tpu.memory_space<vmem>>, vector<2x128xf32>
    tpu.vector_store %arg4[%c0_7, %c0_8], %14 {strides = array<i32>} : memref<2x128xf32, #tpu.memory_space<vmem>>, vector<2x128xf32>,
    %cst_9 = arith.constant 1.000000e+00 : f32
    %cst_10 = arith.constant 0.000000e+00 : f32
    %16 = vector.broadcast %cst_9 : f32 to vector<2x128xf32>
    %17 = vector.broadcast %cst_10 : f32 to vector<2x128xf32>
    %18 = arith.select %12, %16, %17 : vector<2x128xi1>, vector<2x128xf32>
    %19 = arith.truncf %18 : vector<2x128xf32> to vector<2x128xbf16>
    %20 = arith.index_cast %c0_i32_1 : i32 to index
    %c0_11 = arith.constant 0 : index
    %c0_12 = arith.constant 0 : index
    %21 = vector.load %arg3[%20, %c0_11, %c0_12] : memref<8x2x128xbf16, #tpu.memory_space<vmem>>, vector<1x2x128xbf16>
    %22 = vector.shape_cast %21 : vector<1x2x128xbf16> to vector<2x128xbf16>
    %23 = vector.shape_cast %19 : vector<2x128xbf16> to vector<1x2x128xbf16>
    tpu.vector_store %arg3[%20, %c0_11, %c0_12], %23 {strides = array<i32>} : memref<8x2x128xbf16, #tpu.memory_space<vmem>>, vector<1x2x128xbf16>,
    %c1_i32 = arith.constant 1 : i32
    %24 = arith.index_cast %c1_i32 : i32 to index
    %c0_13 = arith.constant 0 : index
    %c0_14 = arith.constant 0 : index
    %25 = vector.load %arg2[%24, %c0_13, %c0_14] : memref<8x2x128xf32, #tpu.memory_space<vmem>>, vector<1x2x128xf32>
    %26 = vector.shape_cast %25 : vector<1x2x128xf32> to vector<2x128xf32>
    %c0_15 = arith.constant 0 : index
    %c0_16 = arith.constant 0 : index
    %27 = vector.load %arg4[%c0_15, %c0_16] : memref<2x128xf32, #tpu.memory_space<vmem>>, vector<2x128xf32>
    %28 = arith.subf %26, %27 : vector<2x128xf32>
    %cst_17 = arith.constant 5.000000e-01 : f32
    %29 = vector.broadcast %cst_17 : f32 to vector<2x128xf32>
    %30 = arith.mulf %28, %29 : vector<2x128xf32>
    %31 = arith.addf %27, %30 : vector<2x128xf32>
    %cst_18 = arith.constant 1.000000e+00 : f32
    %32 = vector.broadcast %cst_18 : f32 to vector<2x128xf32>
    %33 = arith.cmpf oge, %31, %32 : vector<2x128xf32>
    %cst_19 = arith.constant 0.000000e+00 : f32
    %34 = vector.broadcast %cst_19 : f32 to vector<2x128xf32>
    %35 = arith.select %33, %34, %31 : vector<2x128xi1>, vector<2x128xf32>
    %c0_20 = arith.constant 0 : index
    %c0_21 = arith.constant 0 : index
    %36 = vector.load %arg4[%c0_20, %c0_21] : memref<2x128xf32, #tpu.memory_space<vmem>>, vector<2x128xf32>
    tpu.vector_store %arg4[%c0_20, %c0_21], %35 {strides = array<i32>} : memref<2x128xf32, #tpu.memory_space<vmem>>, vector<2x128xf32>,
    %cst_22 = arith.constant 1.000000e+00 : f32
    %cst_23 = arith.constant 0.000000e+00 : f32
    %37 = vector.broadcast %cst_22 : f32 to vector<2x128xf32>
    %38 = vector.broadcast %cst_23 : f32 to vector<2x128xf32>
    %39 = arith.select %33, %37, %38 : vector<2x128xi1>, vector<2x128xf32>
    %40 = arith.truncf %39 : vector<2x128xf32> to vector<2x128xbf16>
    %41 = arith.index_cast %c1_i32 : i32 to index
    %c0_24 = arith.constant 0 : index
    %c0_25 = arith.constant 0 : index
    %42 = vector.load %arg3[%41, %c0_24, %c0_25] : memref<8x2x128xbf16, #tpu.memory_space<vmem>>, vector<1x2x128xbf16>
    %43 = vector.shape_cast %42 : vector<1x2x128xbf16> to vector<2x128xbf16>
    %44 = vector.shape_cast %40 : vector<2x128xbf16> to vector<1x2x128xbf16>
    tpu.vector_store %arg3[%41, %c0_24, %c0_25], %44 {strides = array<i32>} : memref<8x2x128xbf16, #tpu.memory_space<vmem>>, vector<1x2x128xbf16>,
    %c2_i32 = arith.constant 2 : i32
    %45 = arith.index_cast %c2_i32 : i32 to index
    %c0_26 = arith.constant 0 : index
    %c0_27 = arith.constant 0 : index
    %46 = vector.load %arg2[%45, %c0_26, %c0_27] : memref<8x2x128xf32, #tpu.memory_space<vmem>>, vector<1x2x128xf32>
    %47 = vector.shape_cast %46 : vector<1x2x128xf32> to vector<2x128xf32>
    %c0_28 = arith.constant 0 : index
    %c0_29 = arith.constant 0 : index
    %48 = vector.load %arg4[%c0_28, %c0_29] : memref<2x128xf32, #tpu.memory_space<vmem>>, vector<2x128xf32>
    %49 = arith.subf %47, %48 : vector<2x128xf32>
    %cst_30 = arith.constant 5.000000e-01 : f32
    %50 = vector.broadcast %cst_30 : f32 to vector<2x128xf32>
    %51 = arith.mulf %49, %50 : vector<2x128xf32>
    %52 = arith.addf %48, %51 : vector<2x128xf32>
    %cst_31 = arith.constant 1.000000e+00 : f32
    %53 = vector.broadcast %cst_31 : f32 to vector<2x128xf32>
    %54 = arith.cmpf oge, %52, %53 : vector<2x128xf32>
    %cst_32 = arith.constant 0.000000e+00 : f32
    %55 = vector.broadcast %cst_32 : f32 to vector<2x128xf32>
    %56 = arith.select %54, %55, %52 : vector<2x128xi1>, vector<2x128xf32>
    %c0_33 = arith.constant 0 : index
    %c0_34 = arith.constant 0 : index
    %57 = vector.load %arg4[%c0_33, %c0_34] : memref<2x128xf32, #tpu.memory_space<vmem>>, vector<2x128xf32>
    tpu.vector_store %arg4[%c0_33, %c0_34], %56 {strides = array<i32>} : memref<2x128xf32, #tpu.memory_space<vmem>>, vector<2x128xf32>,
    %cst_35 = arith.constant 1.000000e+00 : f32
    %cst_36 = arith.constant 0.000000e+00 : f32
    %58 = vector.broadcast %cst_35 : f32 to vector<2x128xf32>
    %59 = vector.broadcast %cst_36 : f32 to vector<2x128xf32>
    %60 = arith.select %54, %58, %59 : vector<2x128xi1>, vector<2x128xf32>
    %61 = arith.truncf %60 : vector<2x128xf32> to vector<2x128xbf16>
    %62 = arith.index_cast %c2_i32 : i32 to index
    %c0_37 = arith.constant 0 : index
    %c0_38 = arith.constant 0 : index
    %63 = vector.load %arg3[%62, %c0_37, %c0_38] : memref<8x2x128xbf16, #tpu.memory_space<vmem>>, vector<1x2x128xbf16>
    %64 = vector.shape_cast %63 : vector<1x2x128xbf16> to vector<2x128xbf16>
    %65 = vector.shape_cast %61 : vector<2x128xbf16> to vector<1x2x128xbf16>
    tpu.vector_store %arg3[%62, %c0_37, %c0_38], %65 {strides = array<i32>} : memref<8x2x128xbf16, #tpu.memory_space<vmem>>, vector<1x2x128xbf16>,
    %c3_i32 = arith.constant 3 : i32
    %66 = arith.index_cast %c3_i32 : i32 to index
    %c0_39 = arith.constant 0 : index
    %c0_40 = arith.constant 0 : index
    %67 = vector.load %arg2[%66, %c0_39, %c0_40] : memref<8x2x128xf32, #tpu.memory_space<vmem>>, vector<1x2x128xf32>
    %68 = vector.shape_cast %67 : vector<1x2x128xf32> to vector<2x128xf32>
    %c0_41 = arith.constant 0 : index
    %c0_42 = arith.constant 0 : index
    %69 = vector.load %arg4[%c0_41, %c0_42] : memref<2x128xf32, #tpu.memory_space<vmem>>, vector<2x128xf32>
    %70 = arith.subf %68, %69 : vector<2x128xf32>
    %cst_43 = arith.constant 5.000000e-01 : f32
    %71 = vector.broadcast %cst_43 : f32 to vector<2x128xf32>
    %72 = arith.mulf %70, %71 : vector<2x128xf32>
    %73 = arith.addf %69, %72 : vector<2x128xf32>
    %cst_44 = arith.constant 1.000000e+00 : f32
    %74 = vector.broadcast %cst_44 : f32 to vector<2x128xf32>
    %75 = arith.cmpf oge, %73, %74 : vector<2x128xf32>
    %cst_45 = arith.constant 0.000000e+00 : f32
    %76 = vector.broadcast %cst_45 : f32 to vector<2x128xf32>
    %77 = arith.select %75, %76, %73 : vector<2x128xi1>, vector<2x128xf32>
    %c0_46 = arith.constant 0 : index
    %c0_47 = arith.constant 0 : index
    %78 = vector.load %arg4[%c0_46, %c0_47] : memref<2x128xf32, #tpu.memory_space<vmem>>, vector<2x128xf32>
    tpu.vector_store %arg4[%c0_46, %c0_47], %77 {strides = array<i32>} : memref<2x128xf32, #tpu.memory_space<vmem>>, vector<2x128xf32>,
    %cst_48 = arith.constant 1.000000e+00 : f32
    %cst_49 = arith.constant 0.000000e+00 : f32
    %79 = vector.broadcast %cst_48 : f32 to vector<2x128xf32>
    %80 = vector.broadcast %cst_49 : f32 to vector<2x128xf32>
    %81 = arith.select %75, %79, %80 : vector<2x128xi1>, vector<2x128xf32>
    %82 = arith.truncf %81 : vector<2x128xf32> to vector<2x128xbf16>
    %83 = arith.index_cast %c3_i32 : i32 to index
    %c0_50 = arith.constant 0 : index
    %c0_51 = arith.constant 0 : index
    %84 = vector.load %arg3[%83, %c0_50, %c0_51] : memref<8x2x128xbf16, #tpu.memory_space<vmem>>, vector<1x2x128xbf16>
    %85 = vector.shape_cast %84 : vector<1x2x128xbf16> to vector<2x128xbf16>
    %86 = vector.shape_cast %82 : vector<2x128xbf16> to vector<1x2x128xbf16>
    tpu.vector_store %arg3[%83, %c0_50, %c0_51], %86 {strides = array<i32>} : memref<8x2x128xbf16, #tpu.memory_space<vmem>>, vector<1x2x128xbf16>,
    %c4_i32 = arith.constant 4 : i32
    %87 = arith.index_cast %c4_i32 : i32 to index
    %c0_52 = arith.constant 0 : index
    %c0_53 = arith.constant 0 : index
    %88 = vector.load %arg2[%87, %c0_52, %c0_53] : memref<8x2x128xf32, #tpu.memory_space<vmem>>, vector<1x2x128xf32>
    %89 = vector.shape_cast %88 : vector<1x2x128xf32> to vector<2x128xf32>
    %c0_54 = arith.constant 0 : index
    %c0_55 = arith.constant 0 : index
    %90 = vector.load %arg4[%c0_54, %c0_55] : memref<2x128xf32, #tpu.memory_space<vmem>>, vector<2x128xf32>
    %91 = arith.subf %89, %90 : vector<2x128xf32>
    %cst_56 = arith.constant 5.000000e-01 : f32
    %92 = vector.broadcast %cst_56 : f32 to vector<2x128xf32>
    %93 = arith.mulf %91, %92 : vector<2x128xf32>
    %94 = arith.addf %90, %93 : vector<2x128xf32>
    %cst_57 = arith.constant 1.000000e+00 : f32
    %95 = vector.broadcast %cst_57 : f32 to vector<2x128xf32>
    %96 = arith.cmpf oge, %94, %95 : vector<2x128xf32>
    %cst_58 = arith.constant 0.000000e+00 : f32
    %97 = vector.broadcast %cst_58 : f32 to vector<2x128xf32>
    %98 = arith.select %96, %97, %94 : vector<2x128xi1>, vector<2x128xf32>
    %c0_59 = arith.constant 0 : index
    %c0_60 = arith.constant 0 : index
    %99 = vector.load %arg4[%c0_59, %c0_60] : memref<2x128xf32, #tpu.memory_space<vmem>>, vector<2x128xf32>
    tpu.vector_store %arg4[%c0_59, %c0_60], %98 {strides = array<i32>} : memref<2x128xf32, #tpu.memory_space<vmem>>, vector<2x128xf32>,
    %cst_61 = arith.constant 1.000000e+00 : f32
    %cst_62 = arith.constant 0.000000e+00 : f32
    %100 = vector.broadcast %cst_61 : f32 to vector<2x128xf32>
    %101 = vector.broadcast %cst_62 : f32 to vector<2x128xf32>
    %102 = arith.select %96, %100, %101 : vector<2x128xi1>, vector<2x128xf32>
    %103 = arith.truncf %102 : vector<2x128xf32> to vector<2x128xbf16>
    %104 = arith.index_cast %c4_i32 : i32 to index
    %c0_63 = arith.constant 0 : index
    %c0_64 = arith.constant 0 : index
    %105 = vector.load %arg3[%104, %c0_63, %c0_64] : memref<8x2x128xbf16, #tpu.memory_space<vmem>>, vector<1x2x128xbf16>
    %106 = vector.shape_cast %105 : vector<1x2x128xbf16> to vector<2x128xbf16>
    %107 = vector.shape_cast %103 : vector<2x128xbf16> to vector<1x2x128xbf16>
    tpu.vector_store %arg3[%104, %c0_63, %c0_64], %107 {strides = array<i32>} : memref<8x2x128xbf16, #tpu.memory_space<vmem>>, vector<1x2x128xbf16>,
    %c5_i32 = arith.constant 5 : i32
    %108 = arith.index_cast %c5_i32 : i32 to index
    %c0_65 = arith.constant 0 : index
    %c0_66 = arith.constant 0 : index
    %109 = vector.load %arg2[%108, %c0_65, %c0_66] : memref<8x2x128xf32, #tpu.memory_space<vmem>>, vector<1x2x128xf32>
    %110 = vector.shape_cast %109 : vector<1x2x128xf32> to vector<2x128xf32>
    %c0_67 = arith.constant 0 : index
    %c0_68 = arith.constant 0 : index
    %111 = vector.load %arg4[%c0_67, %c0_68] : memref<2x128xf32, #tpu.memory_space<vmem>>, vector<2x128xf32>
    %112 = arith.subf %110, %111 : vector<2x128xf32>
    %cst_69 = arith.constant 5.000000e-01 : f32
    %113 = vector.broadcast %cst_69 : f32 to vector<2x128xf32>
    %114 = arith.mulf %112, %113 : vector<2x128xf32>
    %115 = arith.addf %111, %114 : vector<2x128xf32>
    %cst_70 = arith.constant 1.000000e+00 : f32
    %116 = vector.broadcast %cst_70 : f32 to vector<2x128xf32>
    %117 = arith.cmpf oge, %115, %116 : vector<2x128xf32>
    %cst_71 = arith.constant 0.000000e+00 : f32
    %118 = vector.broadcast %cst_71 : f32 to vector<2x128xf32>
    %119 = arith.select %117, %118, %115 : vector<2x128xi1>, vector<2x128xf32>
    %c0_72 = arith.constant 0 : index
    %c0_73 = arith.constant 0 : index
    %120 = vector.load %arg4[%c0_72, %c0_73] : memref<2x128xf32, #tpu.memory_space<vmem>>, vector<2x128xf32>
    tpu.vector_store %arg4[%c0_72, %c0_73], %119 {strides = array<i32>} : memref<2x128xf32, #tpu.memory_space<vmem>>, vector<2x128xf32>,
    %cst_74 = arith.constant 1.000000e+00 : f32
    %cst_75 = arith.constant 0.000000e+00 : f32
    %121 = vector.broadcast %cst_74 : f32 to vector<2x128xf32>
    %122 = vector.broadcast %cst_75 : f32 to vector<2x128xf32>
    %123 = arith.select %117, %121, %122 : vector<2x128xi1>, vector<2x128xf32>
    %124 = arith.truncf %123 : vector<2x128xf32> to vector<2x128xbf16>
    %125 = arith.index_cast %c5_i32 : i32 to index
    %c0_76 = arith.constant 0 : index
    %c0_77 = arith.constant 0 : index
    %126 = vector.load %arg3[%125, %c0_76, %c0_77] : memref<8x2x128xbf16, #tpu.memory_space<vmem>>, vector<1x2x128xbf16>
    %127 = vector.shape_cast %126 : vector<1x2x128xbf16> to vector<2x128xbf16>
    %128 = vector.shape_cast %124 : vector<2x128xbf16> to vector<1x2x128xbf16>
    tpu.vector_store %arg3[%125, %c0_76, %c0_77], %128 {strides = array<i32>} : memref<8x2x128xbf16, #tpu.memory_space<vmem>>, vector<1x2x128xbf16>,
    %c6_i32 = arith.constant 6 : i32
    %129 = arith.index_cast %c6_i32 : i32 to index
    %c0_78 = arith.constant 0 : index
    %c0_79 = arith.constant 0 : index
    %130 = vector.load %arg2[%129, %c0_78, %c0_79] : memref<8x2x128xf32, #tpu.memory_space<vmem>>, vector<1x2x128xf32>
    %131 = vector.shape_cast %130 : vector<1x2x128xf32> to vector<2x128xf32>
    %c0_80 = arith.constant 0 : index
    %c0_81 = arith.constant 0 : index
    %132 = vector.load %arg4[%c0_80, %c0_81] : memref<2x128xf32, #tpu.memory_space<vmem>>, vector<2x128xf32>
    %133 = arith.subf %131, %132 : vector<2x128xf32>
    %cst_82 = arith.constant 5.000000e-01 : f32
    %134 = vector.broadcast %cst_82 : f32 to vector<2x128xf32>
    %135 = arith.mulf %133, %134 : vector<2x128xf32>
    %136 = arith.addf %132, %135 : vector<2x128xf32>
    %cst_83 = arith.constant 1.000000e+00 : f32
    %137 = vector.broadcast %cst_83 : f32 to vector<2x128xf32>
    %138 = arith.cmpf oge, %136, %137 : vector<2x128xf32>
    %cst_84 = arith.constant 0.000000e+00 : f32
    %139 = vector.broadcast %cst_84 : f32 to vector<2x128xf32>
    %140 = arith.select %138, %139, %136 : vector<2x128xi1>, vector<2x128xf32>
    %c0_85 = arith.constant 0 : index
    %c0_86 = arith.constant 0 : index
    %141 = vector.load %arg4[%c0_85, %c0_86] : memref<2x128xf32, #tpu.memory_space<vmem>>, vector<2x128xf32>
    tpu.vector_store %arg4[%c0_85, %c0_86], %140 {strides = array<i32>} : memref<2x128xf32, #tpu.memory_space<vmem>>, vector<2x128xf32>,
    %cst_87 = arith.constant 1.000000e+00 : f32
    %cst_88 = arith.constant 0.000000e+00 : f32
    %142 = vector.broadcast %cst_87 : f32 to vector<2x128xf32>
    %143 = vector.broadcast %cst_88 : f32 to vector<2x128xf32>
    %144 = arith.select %138, %142, %143 : vector<2x128xi1>, vector<2x128xf32>
    %145 = arith.truncf %144 : vector<2x128xf32> to vector<2x128xbf16>
    %146 = arith.index_cast %c6_i32 : i32 to index
    %c0_89 = arith.constant 0 : index
    %c0_90 = arith.constant 0 : index
    %147 = vector.load %arg3[%146, %c0_89, %c0_90] : memref<8x2x128xbf16, #tpu.memory_space<vmem>>, vector<1x2x128xbf16>
    %148 = vector.shape_cast %147 : vector<1x2x128xbf16> to vector<2x128xbf16>
    %149 = vector.shape_cast %145 : vector<2x128xbf16> to vector<1x2x128xbf16>
    tpu.vector_store %arg3[%146, %c0_89, %c0_90], %149 {strides = array<i32>} : memref<8x2x128xbf16, #tpu.memory_space<vmem>>, vector<1x2x128xbf16>,
    %c7_i32 = arith.constant 7 : i32
    %150 = arith.index_cast %c7_i32 : i32 to index
    %c0_91 = arith.constant 0 : index
    %c0_92 = arith.constant 0 : index
    %151 = vector.load %arg2[%150, %c0_91, %c0_92] : memref<8x2x128xf32, #tpu.memory_space<vmem>>, vector<1x2x128xf32>
    %152 = vector.shape_cast %151 : vector<1x2x128xf32> to vector<2x128xf32>
    %c0_93 = arith.constant 0 : index
    %c0_94 = arith.constant 0 : index
    %153 = vector.load %arg4[%c0_93, %c0_94] : memref<2x128xf32, #tpu.memory_space<vmem>>, vector<2x128xf32>
    %154 = arith.subf %152, %153 : vector<2x128xf32>
    %cst_95 = arith.constant 5.000000e-01 : f32
    %155 = vector.broadcast %cst_95 : f32 to vector<2x128xf32>
    %156 = arith.mulf %154, %155 : vector<2x128xf32>
    %157 = arith.addf %153, %156 : vector<2x128xf32>
    %cst_96 = arith.constant 1.000000e+00 : f32
    %158 = vector.broadcast %cst_96 : f32 to vector<2x128xf32>
    %159 = arith.cmpf oge, %157, %158 : vector<2x128xf32>
    %cst_97 = arith.constant 0.000000e+00 : f32
    %160 = vector.broadcast %cst_97 : f32 to vector<2x128xf32>
    %161 = arith.select %159, %160, %157 : vector<2x128xi1>, vector<2x128xf32>
    %c0_98 = arith.constant 0 : index
    %c0_99 = arith.constant 0 : index
    %162 = vector.load %arg4[%c0_98, %c0_99] : memref<2x128xf32, #tpu.memory_space<vmem>>, vector<2x128xf32>
    tpu.vector_store %arg4[%c0_98, %c0_99], %161 {strides = array<i32>} : memref<2x128xf32, #tpu.memory_space<vmem>>, vector<2x128xf32>,
    %cst_100 = arith.constant 1.000000e+00 : f32
    %cst_101 = arith.constant 0.000000e+00 : f32
    %163 = vector.broadcast %cst_100 : f32 to vector<2x128xf32>
    %164 = vector.broadcast %cst_101 : f32 to vector<2x128xf32>
    %165 = arith.select %159, %163, %164 : vector<2x128xi1>, vector<2x128xf32>
    %166 = arith.truncf %165 : vector<2x128xf32> to vector<2x128xbf16>
    %167 = arith.index_cast %c7_i32 : i32 to index
    %c0_102 = arith.constant 0 : index
    %c0_103 = arith.constant 0 : index
    %168 = vector.load %arg3[%167, %c0_102, %c0_103] : memref<8x2x128xbf16, #tpu.memory_space<vmem>>, vector<1x2x128xbf16>
    %169 = vector.shape_cast %168 : vector<1x2x128xbf16> to vector<2x128xbf16>
    %170 = vector.shape_cast %166 : vector<2x128xbf16> to vector<1x2x128xbf16>
    tpu.vector_store %arg3[%167, %c0_102, %c0_103], %170 {strides = array<i32>} : memref<8x2x128xbf16, #tpu.memory_space<vmem>>, vector<1x2x128xbf16>,
    %c8_i32 = arith.constant 8 : i32
    return
  }
  func.func @transform_0(%arg0: i32, %arg1: i32) -> (i32, i32, i32) {
    %c0_i32 = arith.constant 0 : i32
    %c0_i32_0 = arith.constant 0 : i32
    return %arg1, %arg0, %c0_i32 : i32, i32, i32
  }
  func.func @transform_1(%arg0: i32, %arg1: i32) -> (i32, i32, i32) {
    %c0_i32 = arith.constant 0 : i32
    %c0_i32_0 = arith.constant 0 : i32
    return %arg1, %arg0, %c0_i32 : i32, i32, i32
  }
}

</mosaic_0001>

<llo_original>
// kernel: tpu_custom_call.1
$region0: #{tpu_custom_call.1}
  #allocation0 [shape = 'u32[]', space=smem, size = 0x4, offset = 0x4, fixed_abs, tag = 'smem constant byte address 0x4 - core index']
  #allocation1 [shape = 'u32[144,128]{1,0:T(1,128)}', space=vmem, size = 0x12000, scoped, tag = 'internal scratch']
  #allocation2 [shape = 'f32[2,128]{1,0:T(2,128)}', space=vmem, size = 0x400, scoped, tag = 'scratch operand']
  %s0 = inlined_call_operand.hbm [shape: f32[8,2,128], index: 0, kind: input, shape index: {}]
  %s1 = inlined_call_operand.hbm [shape: bf16[8,2,128], index: 1, kind: output, shape index: {}]
  %s2 = sld [smem:[#allocation0]]
  $region22: #{tpu_custom_call.1} parent=0
    _
  %s4 = ssub.s32 1, %s2
  %s5 = scalar_select 0, %s4, %s2
  $region1: #{tpu_custom_call.1} parent=0
    #allocation3 [shape = 'u8[8192]{0}', space=vmem, size = 0x2000, scoped, tag = 'input window, operand 0, single buffered']
    #allocation4 [shape = 's32[1]{0}', space=sflag, size = 0x4, scoped, tag = 'scoped memory for tpu_custom_call.1']
    #allocation5 [shape = 's32[1]{0}', space=sflag, size = 0x4, scoped, tag = 'scoped memory for tpu_custom_call.1']
    #allocation6 [shape = 'u8[4096]{0}', space=vmem, size = 0x1000, scoped, tag = 'output window, operand 0, single buffered']
    %6 = vsyncpa [#allocation4], 0
    %7 = vsyncpa [#allocation5], 0
    // Predicated region
    $region2: #{tpu_custom_call.1} parent=1 // pred_check
      _
    $region3: #{tpu_custom_call.1} parent=1 // pred_check_branch
      %9 = sbr.rel (0) target = $region5
    $region4: #{tpu_custom_call.1} parent=1 // pred_region
      %s11 = ssub.s32 256, 256
      %12 = vsyncadd [#allocation4], %s11
      %s13 = sshll.u32 [#allocation3], 4
      %s14 = int_to_ptr.vmem [resolvable:$true] %s13
      %19 = dma.hbm_to_vmem [thread:$0]  %s0, 256, %s14, [#allocation4], 32, 32, 2
    $region5: #{tpu_custom_call.1} parent=1 // pred_fallthru
      _
    // Predicated region
    $region6: #{tpu_custom_call.1} parent=1 // pred_check
      _
    $region7: #{tpu_custom_call.1} parent=1 // pred_check_branch
      %21 = sbr.rel (0) target = $region9
    $region8: #{tpu_custom_call.1} parent=1 // pred_region
      %22 = dma.done [#allocation4], 256
    $region9: #{tpu_custom_call.1} parent=1 // pred_fallthru
      _
    %p23 = scmp.eq.s32.totalorder 0, 0
    // Predicated region
    $region10: #{tpu_custom_call.1} parent=1 // pred_check
      %p24 = pneg %p23
    $region11: #{tpu_custom_call.1} parent=1 // pred_check_branch
      %26 = sbr.rel (%p24) target = $region13
    $region12: #{tpu_custom_call.1} parent=1 // pred_region
      %27 = vst [vmem:[#allocation2] sm:$0x3] 0.0
    $region13: #{tpu_custom_call.1} parent=1 // pred_fallthru
      _
    %v28 = vld [vmem:[#allocation3] sm:$0x3]
    %v29 = vld [vmem:[#allocation2] sm:$0x3]
    %v30 = vsub.f32 %v28, %v29
    %v31 = vmul.f32 %v30, 0.5
    %v32 = vadd.f32 %v29, %v31
    %vm33 = vcmp.ge.f32.partialorder %v32, 1.0
    %v34 = vsel %vm33, 0.0, %v32
    %35 = vst [vmem:[#allocation2] sm:$0x3] %v34
    %v36 = vsel %vm33, 1.0, 0.0
    %v37 = vpack.c.bf16 %v36, %v36
    %38 = vst [vmem:[#allocation6] sm:$0x1] %v37
    %s39 = scalar_lea.vmem [#allocation3], 2
    %v40 = vld [vmem:[%s39] sm:$0x3]
    %v41 = vld [vmem:[#allocation2] sm:$0x3]
    %v42 = vsub.f32 %v40, %v41
    %v43 = vmul.f32 %v42, 0.5
    %v44 = vadd.f32 %v41, %v43
    %vm45 = vcmp.ge.f32.partialorder %v44, 1.0
    %v46 = vsel %vm45, 0.0, %v44
    %47 = vst [vmem:[#allocation2] sm:$0x3] %v46
    %v48 = vsel %vm45, 1.0, 0.0
    %v49 = vpack.c.bf16 %v48, %v48
    %s50 = scalar_lea.vmem [#allocation6], 1
    %51 = vst [vmem:[%s50] sm:$0x1] %v49
    %s52 = scalar_lea.vmem [#allocation3], 4
    %v53 = vld [vmem:[%s52] sm:$0x3]
    %v54 = vld [vmem:[#allocation2] sm:$0x3]
    %v55 = vsub.f32 %v53, %v54
    %v56 = vmul.f32 %v55, 0.5
    %v57 = vadd.f32 %v54, %v56
    %vm58 = vcmp.ge.f32.partialorder %v57, 1.0
    %v59 = vsel %vm58, 0.0, %v57
    %60 = vst [vmem:[#allocation2] sm:$0x3] %v59
    %v61 = vsel %vm58, 1.0, 0.0
    %v62 = vpack.c.bf16 %v61, %v61
    %s63 = scalar_lea.vmem [#allocation6], 2
    %64 = vst [vmem:[%s63] sm:$0x1] %v62
    %s65 = scalar_lea.vmem [#allocation3], 6
    %v66 = vld [vmem:[%s65] sm:$0x3]
    %v67 = vld [vmem:[#allocation2] sm:$0x3]
    %v68 = vsub.f32 %v66, %v67
    %v69 = vmul.f32 %v68, 0.5
    %v70 = vadd.f32 %v67, %v69
    %vm71 = vcmp.ge.f32.partialorder %v70, 1.0
    %v72 = vsel %vm71, 0.0, %v70
    %73 = vst [vmem:[#allocation2] sm:$0x3] %v72
    %v74 = vsel %vm71, 1.0, 0.0
    %v75 = vpack.c.bf16 %v74, %v74
    %s76 = scalar_lea.vmem [#allocation6], 3
    %77 = vst [vmem:[%s76] sm:$0x1] %v75
    %s78 = scalar_lea.vmem [#allocation3], 8
    %v79 = vld [vmem:[%s78] sm:$0x3]
    %v80 = vld [vmem:[#allocation2] sm:$0x3]
    %v81 = vsub.f32 %v79, %v80
    %v82 = vmul.f32 %v81, 0.5
    %v83 = vadd.f32 %v80, %v82
    %vm84 = vcmp.ge.f32.partialorder %v83, 1.0
    %v85 = vsel %vm84, 0.0, %v83
    %86 = vst [vmem:[#allocation2] sm:$0x3] %v85
    %v87 = vsel %vm84, 1.0, 0.0
    %v88 = vpack.c.bf16 %v87, %v87
    %s89 = scalar_lea.vmem [#allocation6], 4
    %90 = vst [vmem:[%s89] sm:$0x1] %v88
    %s91 = scalar_lea.vmem [#allocation3], 10
    %v92 = vld [vmem:[%s91] sm:$0x3]
    %v93 = vld [vmem:[#allocation2] sm:$0x3]
    %v94 = vsub.f32 %v92, %v93
    %v95 = vmul.f32 %v94, 0.5
    %v96 = vadd.f32 %v93, %v95
    %vm97 = vcmp.ge.f32.partialorder %v96, 1.0
    %v98 = vsel %vm97, 0.0, %v96
    %99 = vst [vmem:[#allocation2] sm:$0x3] %v98
    %v100 = vsel %vm97, 1.0, 0.0
    %v101 = vpack.c.bf16 %v100, %v100
    %s102 = scalar_lea.vmem [#allocation6], 5
    %103 = vst [vmem:[%s102] sm:$0x1] %v101
    %s104 = scalar_lea.vmem [#allocation3], 12
    %v105 = vld [vmem:[%s104] sm:$0x3]
    %v106 = vld [vmem:[#allocation2] sm:$0x3]
    %v107 = vsub.f32 %v105, %v106
    %v108 = vmul.f32 %v107, 0.5
    %v109 = vadd.f32 %v106, %v108
    %vm110 = vcmp.ge.f32.partialorder %v109, 1.0
    %v111 = vsel %vm110, 0.0, %v109
    %112 = vst [vmem:[#allocation2] sm:$0x3] %v111
    %v113 = vsel %vm110, 1.0, 0.0
    %v114 = vpack.c.bf16 %v113, %v113
    %s115 = scalar_lea.vmem [#allocation6], 6
    %116 = vst [vmem:[%s115] sm:$0x1] %v114
    %s117 = scalar_lea.vmem [#allocation3], 14
    %v118 = vld [vmem:[%s117] sm:$0x3]
    %v119 = vld [vmem:[#allocation2] sm:$0x3]
    %v120 = vsub.f32 %v118, %v119
    %v121 = vmul.f32 %v120, 0.5
    %v122 = vadd.f32 %v119, %v121
    %vm123 = vcmp.ge.f32.partialorder %v122, 1.0
    %v124 = vsel %vm123, 0.0, %v122
    %125 = vst [vmem:[#allocation2] sm:$0x3] %v124
    %v126 = vsel %vm123, 1.0, 0.0
    %v127 = vpack.c.bf16 %v126, %v126
    %s128 = scalar_lea.vmem [#allocation6], 7
    %129 = vst [vmem:[%s128] sm:$0x1] %v127
    // Predicated region
    $region14: #{tpu_custom_call.1} parent=1 // pred_check
      _
    $region15: #{tpu_custom_call.1} parent=1 // pred_check_branch
      %131 = sbr.rel (0) target = $region17
    $region16: #{tpu_custom_call.1} parent=1 // pred_region
      %s133 = ssub.s32 128, 128
      %134 = vsyncadd [#allocation5], %s133
      %s135 = sshll.u32 [#allocation6], 4
      %s136 = int_to_ptr.vmem [resolvable:$true] %s135
      %141 = dma.vmem_to_hbm [thread:$0]  %s136, 128, %s1, [#allocation5], 16, 16, 1
    $region17: #{tpu_custom_call.1} parent=1 // pred_fallthru
      _
    // Predicated region
    $region18: #{tpu_custom_call.1} parent=1 // pred_check
      _
    $region19: #{tpu_custom_call.1} parent=1 // pred_check_branch
      %143 = sbr.rel (0) target = $region21
    $region20: #{tpu_custom_call.1} parent=1 // pred_region
      %144 = dma.done [#allocation5], 128
    $region21: #{tpu_custom_call.1} parent=1 // pred_fallthru
      _
    %145 = vsyncpa [#allocation4], 1
    %146 = vsyncpa [#allocation5], 1

</llo_original>
